<compile_context>
chip_gen: v5e
topology: v5e:2x2
jax: 0.10.0
libtpu: 0.0.40
codegen_flags: <defaults>
</compile_context>

<pallas_src>
import functools

import jax
import jax.numpy as jnp
from jax import lax
from jax.experimental import pallas as pl
from jax.experimental.pallas import tpu as pltpu

LANE = 128     # lane (fast) axis width; hidden feature dims are padded to this
SUBLANE = 8    # sublane granularity; row tiles / narrow K are multiples of this


def _round_up(n, m):
    return ((n + m - 1) // m) * m


def _make_mlp_softmax_kernel(num_layers: int, nonlinear: str, in_pad: int,
                             out_size: int):
    """kernel(x_tile, w_stack, b_stack, out_tile).

    x_tile:  (tile_rows, in_pad)  bf16 (real features zero-padded to in_pad)
    w_stack: (L, LANE, LANE)      bf16, zero-padded per layer
    b_stack: (L, 1, LANE)         f32,  zero-padded per layer
    out:     (tile_rows, out_size) f32 softmax probabilities
    """

    def _nonlin(h):
        if nonlinear == "relu":
            return jnp.maximum(h, 0.0)
        return jnp.tanh(h)
        # TODO(synk): on v5e a VPU polynomial tanh may beat the EUP jnp.tanh
        # once bandwidth is no longer the bottleneck.

    def kernel(x_ref, w_ref, b_ref, o_ref):
        # Layer 0: bf16 narrow-K matmul straight from the bf16 input tile.
        h = jnp.dot(
            x_ref[...],                               # (tile_rows, in_pad) bf16
            w_ref[0, :in_pad, :],                     # (in_pad, LANE) bf16
            preferred_element_type=jnp.float32,
        )
        h = h + b_ref[0]                              # (1, LANE) f32 broadcast
        h = _nonlin(h)

        # Remaining layers: full 128x128 bf16 MXU matmuls, f32 accumulation.
        for i in range(1, num_layers):                # static unroll (L small)
            h = jnp.dot(
                h.astype(jnp.bfloat16),
                w_ref[i],                             # (LANE, LANE) bf16
                preferred_element_type=jnp.float32,
            )
            h = h + b_ref[i]
            h = _nonlin(h)

        # Numerically-stable softmax over the real `out_size` lanes only.
        lane = lax.broadcasted_iota(jnp.int32, h.shape, 1)
        valid = lane < out_size
        h = jnp.where(valid, h, -1e30)                # exclude padded lanes
        m = jnp.max(h, axis=-1, keepdims=True)
        e = jnp.exp(h - m)
        e = jnp.where(valid, e, 0.0)
        s = jnp.sum(e, axis=-1, keepdims=True)
        p = e * pl.reciprocal(s, approx=False)        # EUP, exact
        o_ref[...] = p[:, :out_size].astype(o_ref.dtype)

    return kernel


def pack_netconf_params(weights, biases):
    """Pack per-layer (w, b) into stacked lane-dense tensors.  Call ONCE,
    outside the per-step forward (this is the hoisted packing work)."""
    assert len(weights) == len(biases)
    w_stack = jnp.stack([
        jnp.pad(
            jnp.asarray(w, jnp.float32),
            ((0, LANE - w.shape[0]), (0, LANE - w.shape[1])),
        ).astype(jnp.bfloat16)
        for w in weights
    ])                                                 # (L, LANE, LANE) bf16
    b_stack = jnp.stack([
        jnp.pad(
            jnp.reshape(jnp.asarray(b, jnp.float32), (1, -1)),
            ((0, 0), (0, LANE - b.shape[-1])),
        )
        for b in biases
    ])                                                 # (L, 1, LANE) f32
    return w_stack, b_stack


def netconf_forward(x, w_stack, b_stack, *, layer_sizes, nonlinear,
                    output_shape, row_tile=512):
    """Pallas implementation of NetConf.forward.

    x:        (batch, in_features) or (in_features,) float array
    w_stack:  (L, 128, 128) bf16 from pack_netconf_params
    b_stack:  (L, 1, 128)   f32  from pack_netconf_params
    """
    layer_sizes = tuple(int(s) for s in layer_sizes)
    num_layers = len(layer_sizes) - 1
    in_size = layer_sizes[0]
    out_size = layer_sizes[-1]

    # Guards for the packing / softmax-before-reshape assumptions.
    assert max(layer_sizes) <= LANE, "layer width must be <= 128 for this kernel"
    assert output_shape[-1] == out_size, \
        "softmax-before-reshape requires output_shape[-1] == final layer width"
    assert w_stack.shape == (num_layers, LANE, LANE)
    assert b_stack.shape == (num_layers, 1, LANE)

    x = jnp.asarray(x)
    if x.ndim == 1:
        x = x[None, :]
    batch = x.shape[0]

    # --- Row tiling: big tiles for HBM efficiency, >=2 grid steps when the
    # batch is large enough so v7x's two TensorCores both get work. ----------
    rows_min = _round_up(batch, SUBLANE)
    tile_rows = min(row_tile, rows_min)
    if rows_min >= 4 * SUBLANE:
        tile_rows = min(tile_rows, _round_up(rows_min // 2, SUBLANE))
    rows_pad = _round_up(rows_min, tile_rows)
    grid = (rows_pad // tile_rows,)

    # --- Input: bf16, feature axis padded only to the sublane granularity. --
    in_pad = _round_up(in_size, SUBLANE)
    x_pad = jnp.pad(
        x.astype(jnp.bfloat16),
        ((0, rows_pad - batch), (0, in_pad - in_size)),
    )                                                  # (rows_pad, in_pad) bf16

    kernel = _make_mlp_softmax_kernel(num_layers, nonlinear, in_pad, out_size)

    cost = pl.CostEstimate(
        flops=2 * num_layers * rows_pad * LANE * LANE,
        transcendentals=rows_pad * LANE
        + (num_layers * rows_pad * LANE if nonlinear == "tanh" else 0),
        bytes_accessed=rows_pad * in_pad * 2            # x read (bf16)
        + rows_pad * out_size * 4                       # out write (f32)
        + num_layers * LANE * LANE * 2                  # weights (bf16)
        + num_layers * LANE * 4,                        # biases (f32)
    )

    out = pl.pallas_call(
        kernel,
        out_shape=jax.ShapeDtypeStruct((rows_pad, out_size), jnp.float32),
        grid=grid,
        in_specs=[
            # x: tiled over rows; last dim equals the full array dim (exempt
            # from the 128-lane rule) so no lane padding is stored in HBM.
            pl.BlockSpec((tile_rows, in_pad), lambda i: (i, 0)),
            # weights / biases: resident across all grid steps (constant map)
            pl.BlockSpec((num_layers, LANE, LANE), lambda i: (0, 0, 0)),
            pl.BlockSpec((num_layers, 1, LANE), lambda i: (0, 0, 0)),
        ],
        # Only the real out_size lanes are written back (16x less HBM write
        # traffic than a 128-lane f32 slab).
        out_specs=pl.BlockSpec((tile_rows, out_size), lambda i: (i, 0)),
        compiler_params=pltpu.CompilerParams(
            dimension_semantics=("parallel",),
        ),
        cost_estimate=cost,
    )(x_pad, w_stack, b_stack)

    # Drop row padding, then reshape to the configured output shape.
    out = out[:batch, :]
    return out.reshape(output_shape)


# ---------------------------------------------------------------------------
# Parameter init + pure-JAX reference for the correctness check.
# ---------------------------------------------------------------------------
def xavier_uniform(key, fan_in, fan_out):
    bound = (6.0 / (fan_in + fan_out)) ** 0.5
    return jax.random.uniform(
        key, (fan_in, fan_out), dtype=jnp.float32, minval=-bound, maxval=bound
    )


def build_params(sizes, key):
    weights, biases = [], []
    for i in range(len(sizes) - 1):
        key, wk, bk = jax.random.split(key, 3)
        weights.append(xavier_uniform(wk, sizes[i], sizes[i + 1]))
        biases.append(
            jax.random.uniform(
                bk, (1, sizes[i + 1]), dtype=jnp.float32, minval=-0.1, maxval=0.1
            )
        )
    return weights, biases


def reference_forward(x, weights, biases, nonlinear, output_shape):
    h = x
    for w, b in zip(weights, biases):
        h = h @ w + b
        h = jnp.maximum(h, 0.0) if nonlinear == "relu" else jnp.tanh(h)
    h = h.reshape(output_shape)
    axis = 0 if h.ndim == 1 else h.ndim - 1
    return jax.nn.softmax(h, axis=axis)


if __name__ == "__main__":
    # net_config equivalent:
    #   layers = [16, 32, 32, 8], non_linear_function = 'relu',
    #   output_shape = (2, 8)   (batch=2, final layer width=8)
    sizes = [16, 32, 32, 8]
    nonlinear = "relu"
    batch = 2
    output_shape = (batch, sizes[-1])

    key = jax.random.PRNGKey(0)
    key, xk, pk = jax.random.split(key, 3)
    x = jax.random.normal(xk, (batch, sizes[0]), dtype=jnp.float32)
    weights, biases = build_params(sizes, pk)

    # Pack parameters ONCE (hoisted out of the jitted forward).
    w_stack, b_stack = pack_netconf_params(weights, biases)

    fwd = jax.jit(
        functools.partial(
            netconf_forward,
            layer_sizes=tuple(sizes),
            nonlinear=nonlinear,
            output_shape=output_shape,
            row_tile=512,
        )
    )
    out = fwd(x, w_stack, b_stack)
    jax.block_until_ready(out)

    ref = reference_forward(x, weights, biases, nonlinear, output_shape)
    assert out.shape == output_shape
    # bf16 matmuls => relaxed tolerance vs the f32 reference.
    assert jnp.allclose(out, ref, atol=2e-2, rtol=2e-2)
    # exact reciprocal => rows sum to 1 to fp accuracy.
    assert jnp.allclose(jnp.sum(out, axis=-1), 1.0, atol=1e-3)

    print("KERNEL_OK")
</pallas_src>

<mosaic_0001>
module attributes {stable_mosaic.version = 11 : i64} {
  func.func @kernel(%arg0: i32, %arg1: memref<8x16xbf16, #tpu.memory_space<vmem>>, %arg2: memref<3x128x128xbf16, #tpu.memory_space<vmem>>, %arg3: memref<3x1x128xf32, #tpu.memory_space<vmem>>, %arg4: memref<8x8xf32, #tpu.memory_space<vmem>>) attributes {dimension_semantics = [#tpu.dimension_semantics<parallel>], iteration_bounds = array<i64: 1>, scalar_prefetch = 0 : i64, scratch_operands = 0 : i64, tpu.core_type = #tpu.core_type<tc>, window_params = [{transform_indices = @transform_0, window_bounds = array<i64: 8, 16>}, {pipeline_mode = #tpu.pipeline_mode<synchronous>, transform_indices = @transform_1, window_bounds = array<i64: 3, 128, 128>}, {pipeline_mode = #tpu.pipeline_mode<synchronous>, transform_indices = @transform_2, window_bounds = array<i64: 3, 1, 128>}, {transform_indices = @transform_3, window_bounds = array<i64: 8, 8>}]} {
    %c0 = arith.constant 0 : index
    %c0_0 = arith.constant 0 : index
    %0 = vector.load %arg1[%c0, %c0_0] : memref<8x16xbf16, #tpu.memory_space<vmem>>, vector<8x16xbf16>
    %c0_1 = arith.constant 0 : index
    %c0_2 = arith.constant 0 : index
    %c0_3 = arith.constant 0 : index
    %1 = vector.load %arg2[%c0_1, %c0_2, %c0_3] : memref<3x128x128xbf16, #tpu.memory_space<vmem>>, vector<1x16x128xbf16>
    %2 = vector.shape_cast %1 : vector<1x16x128xbf16> to vector<16x128xbf16>
    %cst = arith.constant dense<0.000000e+00> : vector<8x128xf32>
    %3 = tpu.matmul %0, %2, %cst {dimension_numbers = #tpu.dot_dimension_numbers<[1], [0], [0], [1], [0, 0, 1, 1], [], []>} : vector<8x16xbf16>, vector<16x128xbf16>, vector<8x128xf32> -> vector<8x128xf32>
    %c0_4 = arith.constant 0 : index
    %c0_5 = arith.constant 0 : index
    %c0_6 = arith.constant 0 : index
    %4 = vector.load %arg3[%c0_4, %c0_5, %c0_6] : memref<3x1x128xf32, #tpu.memory_space<vmem>>, vector<1x1x128xf32>
    %5 = vector.shape_cast %4 : vector<1x1x128xf32> to vector<1x128xf32>
    %6 = vector.broadcast %5 : vector<1x128xf32> to vector<8x128xf32>
    %7 = arith.addf %3, %6 : vector<8x128xf32>
    %cst_7 = arith.constant 0.000000e+00 : f32
    %8 = vector.broadcast %cst_7 : f32 to vector<8x128xf32>
    %9 = arith.maximumf %7, %8 : vector<8x128xf32>
    %10 = arith.truncf %9 : vector<8x128xf32> to vector<8x128xbf16>
    %c1 = arith.constant 1 : index
    %c0_8 = arith.constant 0 : index
    %c0_9 = arith.constant 0 : index
    %11 = vector.load %arg2[%c1, %c0_8, %c0_9] : memref<3x128x128xbf16, #tpu.memory_space<vmem>>, vector<1x128x128xbf16>
    %12 = vector.shape_cast %11 : vector<1x128x128xbf16> to vector<128x128xbf16>
    %cst_10 = arith.constant dense<0.000000e+00> : vector<8x128xf32>
    %13 = tpu.matmul %10, %12, %cst_10 {dimension_numbers = #tpu.dot_dimension_numbers<[1], [0], [0], [1], [0, 0, 1, 1], [], []>} : vector<8x128xbf16>, vector<128x128xbf16>, vector<8x128xf32> -> vector<8x128xf32>
    %c1_11 = arith.constant 1 : index
    %c0_12 = arith.constant 0 : index
    %c0_13 = arith.constant 0 : index
    %14 = vector.load %arg3[%c1_11, %c0_12, %c0_13] : memref<3x1x128xf32, #tpu.memory_space<vmem>>, vector<1x1x128xf32>
    %15 = vector.shape_cast %14 : vector<1x1x128xf32> to vector<1x128xf32>
    %16 = vector.broadcast %15 : vector<1x128xf32> to vector<8x128xf32>
    %17 = arith.addf %13, %16 : vector<8x128xf32>
    %cst_14 = arith.constant 0.000000e+00 : f32
    %18 = vector.broadcast %cst_14 : f32 to vector<8x128xf32>
    %19 = arith.maximumf %17, %18 : vector<8x128xf32>
    %20 = arith.truncf %19 : vector<8x128xf32> to vector<8x128xbf16>
    %c2 = arith.constant 2 : index
    %c0_15 = arith.constant 0 : index
    %c0_16 = arith.constant 0 : index
    %21 = vector.load %arg2[%c2, %c0_15, %c0_16] : memref<3x128x128xbf16, #tpu.memory_space<vmem>>, vector<1x128x128xbf16>
    %22 = vector.shape_cast %21 : vector<1x128x128xbf16> to vector<128x128xbf16>
    %cst_17 = arith.constant dense<0.000000e+00> : vector<8x128xf32>
    %23 = tpu.matmul %20, %22, %cst_17 {dimension_numbers = #tpu.dot_dimension_numbers<[1], [0], [0], [1], [0, 0, 1, 1], [], []>} : vector<8x128xbf16>, vector<128x128xbf16>, vector<8x128xf32> -> vector<8x128xf32>
    %c2_18 = arith.constant 2 : index
    %c0_19 = arith.constant 0 : index
    %c0_20 = arith.constant 0 : index
    %24 = vector.load %arg3[%c2_18, %c0_19, %c0_20] : memref<3x1x128xf32, #tpu.memory_space<vmem>>, vector<1x1x128xf32>
    %25 = vector.shape_cast %24 : vector<1x1x128xf32> to vector<1x128xf32>
    %26 = vector.broadcast %25 : vector<1x128xf32> to vector<8x128xf32>
    %27 = arith.addf %23, %26 : vector<8x128xf32>
    %cst_21 = arith.constant 0.000000e+00 : f32
    %28 = vector.broadcast %cst_21 : f32 to vector<8x128xf32>
    %29 = arith.maximumf %27, %28 : vector<8x128xf32>
    %30 = tpu.iota {dimensions = array<i32: 1>} : vector<8x128xi32>
    %c8_i32 = arith.constant 8 : i32
    %31 = vector.broadcast %c8_i32 : i32 to vector<8x128xi32>
    %32 = arith.cmpi slt, %30, %31 : vector<8x128xi32>
    %cst_22 = arith.constant -1.000000e+30 : f32
    %33 = vector.broadcast %cst_22 : f32 to vector<8x128xf32>
    %34 = arith.select %32, %29, %33 : vector<8x128xi1>, vector<8x128xf32>
    %cst_23 = arith.constant dense<0xFF800000> : vector<8xf32>
    %35 = vector.multi_reduction <maximumf>, %34, %cst_23 [1] : vector<8x128xf32> to vector<8xf32>
    %36 = vector.shape_cast %35 : vector<8xf32> to vector<8x1xf32>
    %37 = vector.broadcast %36 : vector<8x1xf32> to vector<8x128xf32>
    %38 = arith.subf %34, %37 : vector<8x128xf32>
    %39 = math.exp %38 : vector<8x128xf32>
    %cst_24 = arith.constant 0.000000e+00 : f32
    %40 = vector.broadcast %cst_24 : f32 to vector<8x128xf32>
    %41 = arith.select %32, %39, %40 : vector<8x128xi1>, vector<8x128xf32>
    %cst_25 = arith.constant dense<0.000000e+00> : vector<8xf32>
    %42 = vector.multi_reduction <add>, %41, %cst_25 [1] : vector<8x128xf32> to vector<8xf32>
    %43 = vector.shape_cast %42 : vector<8xf32> to vector<8x1xf32>
    %44 = tpu.reciprocal %43 : vector<8x1xf32> -> vector<8x1xf32>
    %45 = vector.broadcast %44 : vector<8x1xf32> to vector<8x128xf32>
    %46 = arith.mulf %41, %45 : vector<8x128xf32>
    %47 = vector.extract_strided_slice %46 {offsets = [0, 0], sizes = [8, 8], strides = [1, 1]} : vector<8x128xf32> to vector<8x8xf32>
    %c0_26 = arith.constant 0 : index
    %c0_27 = arith.constant 0 : index
    %48 = vector.load %arg4[%c0_26, %c0_27] : memref<8x8xf32, #tpu.memory_space<vmem>>, vector<8x8xf32>
    tpu.vector_store %arg4[%c0_26, %c0_27], %47 {strides = array<i32>} : memref<8x8xf32, #tpu.memory_space<vmem>>, vector<8x8xf32>,
    return
  }
  func.func @transform_0(%arg0: i32) -> (i32, i32) {
    %c0_i32 = arith.constant 0 : i32
    %c0_i32_0 = arith.constant 0 : i32
    return %arg0, %c0_i32 : i32, i32
  }
  func.func @transform_1(%arg0: i32) -> (i32, i32, i32) {
    %c0_i32 = arith.constant 0 : i32
    %c0_i32_0 = arith.constant 0 : i32
    %c0_i32_1 = arith.constant 0 : i32
    %c0_i32_2 = arith.constant 0 : i32
    return %c0_i32, %c0_i32_0, %c0_i32_1 : i32, i32, i32
  }
  func.func @transform_2(%arg0: i32) -> (i32, i32, i32) {
    %c0_i32 = arith.constant 0 : i32
    %c0_i32_0 = arith.constant 0 : i32
    %c0_i32_1 = arith.constant 0 : i32
    %c0_i32_2 = arith.constant 0 : i32
    return %c0_i32, %c0_i32_0, %c0_i32_1 : i32, i32, i32
  }
  func.func @transform_3(%arg0: i32) -> (i32, i32) {
    %c0_i32 = arith.constant 0 : i32
    %c0_i32_0 = arith.constant 0 : i32
    return %arg0, %c0_i32 : i32, i32
  }
}

</mosaic_0001>

<llo_original>
// kernel: netconf_forward.1
$region0: #{netconf_forward.1}
  #allocation0 [shape = 'u32[]', space=smem, size = 0x4, offset = 0x4, fixed_abs, tag = 'smem constant byte address 0x4 - core index']
  #allocation1 [shape = 'u32[72,128]{1,0:T(1,128)}', space=vmem, size = 0x9000, scoped, tag = 'internal scratch']
  %s0 = inlined_call_operand.vmem [shape: bf16[8,16], index: 0, kind: input, shape index: {}]
  %s1 = inlined_call_operand.hbm [shape: bf16[3,128,128], index: 1, kind: input, shape index: {}]
  %s2 = inlined_call_operand.vmem [shape: f32[3,1,128], index: 2, kind: input, shape index: {}]
  %s3 = inlined_call_operand.vmem [shape: f32[8,8], index: 3, kind: output, shape index: {}]
  %s4 = sld [smem:[#allocation0]]
  $region26: #{netconf_forward.1} parent=0
    _
  %s6 = ssub.s32 1, %s4
  %s7 = scalar_select 0, %s6, %s4
  $region1: #{netconf_forward.1} parent=0
    #allocation2 [shape = 'u8[98304]{0}', space=vmem, size = 0x18000, scoped, tag = 'input window, operand 1, single buffered']
    #allocation3 [shape = 's32[1]{0}', space=sflag, size = 0x4, scoped, tag = 'scoped memory for netconf_forward.1']
    %8 = vsyncpa [#allocation3], 0
    // Predicated region
    $region2: #{netconf_forward.1} parent=1 // pred_check
      _
    $region3: #{netconf_forward.1} parent=1 // pred_check_branch
      %10 = sbr.rel (0) target = $region5
    $region4: #{netconf_forward.1} parent=1 // pred_region
      _
    $region5: #{netconf_forward.1} parent=1 // pred_fallthru
      _
    // Predicated region
    $region6: #{netconf_forward.1} parent=1 // pred_check
      _
    $region7: #{netconf_forward.1} parent=1 // pred_check_branch
      %12 = sbr.rel (0) target = $region9
    $region8: #{netconf_forward.1} parent=1 // pred_region
      %14 = vsyncadd [#allocation3], 0
      %s15 = sshll.u32 %s1, 4
      %s16 = int_to_ptr.hbm [resolvable:$true] %s15
      %s17 = sshll.u32 [#allocation2], 4
      %s18 = int_to_ptr.vmem [resolvable:$true] %s17
      %23 = dma.hbm_to_vmem [thread:$0]  %s16, 3072, %s18, [#allocation3], 64, 64, 4
    $region9: #{netconf_forward.1} parent=1 // pred_fallthru
      _
    // Predicated region
    $region10: #{netconf_forward.1} parent=1 // pred_check
      _
    $region11: #{netconf_forward.1} parent=1 // pred_check_branch
      %25 = sbr.rel (0) target = $region13
    $region12: #{netconf_forward.1} parent=1 // pred_region
      _
    $region13: #{netconf_forward.1} parent=1 // pred_fallthru
      _
    // Predicated region
    $region14: #{netconf_forward.1} parent=1 // pred_check
      _
    $region15: #{netconf_forward.1} parent=1 // pred_check_branch
      %27 = sbr.rel (0) target = $region17
    $region16: #{netconf_forward.1} parent=1 // pred_region
      %29 = dma.done [#allocation3], 3072
    $region17: #{netconf_forward.1} parent=1 // pred_fallthru
      _
    %v31 = vld [vmem:[%s0] sm:$0xf]
    %v32 = vld [vmem:[#allocation2] sm:$0xf]
    %v33 = vld [vmem:[#allocation2 + $0x4] sm:$0xf]
    %v34 = vld [vmem:[%s2] sm:$0x1]
    %v36 = vperm.slane %v34, 0
    %v40 = vunpack.c.l.b16 %v32
    %v41 = vunpack.c.l.b16 %v33
    %v42 = vpack.c.b16 %v41, %v40
    %vm44 = vcmask 130048
    %v46 = vsel %vm44, %v31, 0
    %48 = vmatpush.bf16.msra.mxu0 0
    %49 = vmatpush.bf16.msra.mxu0 0
    %50 = vmatpush.bf16.msra.mxu0 0
    %51 = vmatpush.bf16.msra.mxu0 0
    %52 = vmatpush.bf16.msra.mxu0 0
    %53 = vmatpush.bf16.msra.mxu0 0
    %54 = vmatpush.bf16.msra.mxu0 0
    %55 = vmatpush.bf16.msra.mxu0 %v42
    %56 = vmatmul.bf16.gmra.mxu0 %v46
    %v57 = vpop.f32.mrf.mxu0
    %v58 = vadd.f32 %v36, %v57
    %v59 = vpop.f32.mrf.mxu0
    %60 = vdwg.mxu0
    %v61 = vmax.f32 %v58, 0.0
    %v62 = vpack.c.bf16 %v61, %v61
    %s63 = scalar_lea.vmem [#allocation2], 64
    %v64 = vld [vmem:[%s63] sm:$0xf]
    %v65 = vld [vmem:[%s63 + $0x4] sm:$0xf]
    %v66 = vld [vmem:[%s63 + $0x8] sm:$0xf]
    %v67 = vld [vmem:[%s63 + $0xc] sm:$0xf]
    %v68 = vld [vmem:[%s63 + $0x10] sm:$0xf]
    %v69 = vld [vmem:[%s63 + $0x14] sm:$0xf]
    %v70 = vld [vmem:[%s63 + $0x18] sm:$0xf]
    %v71 = vld [vmem:[%s63 + $0x1c] sm:$0xf]
    %v72 = vld [vmem:[%s63 + $0x20] sm:$0xf]
    %v73 = vld [vmem:[%s63 + $0x24] sm:$0xf]
    %v74 = vld [vmem:[%s63 + $0x28] sm:$0xf]
    %v75 = vld [vmem:[%s63 + $0x2c] sm:$0xf]
    %v76 = vld [vmem:[%s63 + $0x30] sm:$0xf]
    %v77 = vld [vmem:[%s63 + $0x34] sm:$0xf]
    %v78 = vld [vmem:[%s63 + $0x38] sm:$0xf]
    %v79 = vld [vmem:[%s63 + $0x3c] sm:$0xf]
    %s80 = scalar_lea.vmem %s2, 1
    %v81 = vld [vmem:[%s80] sm:$0x1]
    %v83 = vperm.slane %v81, 0
    %v101 = vunpack.c.l.b16 %v64
    %v102 = vunpack.c.l.b16 %v65
    %v103 = vunpack.c.l.b16 %v66
    %v104 = vunpack.c.l.b16 %v67
    %v105 = vunpack.c.l.b16 %v68
    %v106 = vunpack.c.l.b16 %v69
    %v107 = vunpack.c.l.b16 %v70
    %v108 = vunpack.c.l.b16 %v71
    %v109 = vunpack.c.l.b16 %v72
    %v110 = vunpack.c.l.b16 %v73
    %v111 = vunpack.c.l.b16 %v74
    %v112 = vunpack.c.l.b16 %v75
    %v113 = vunpack.c.l.b16 %v76
    %v114 = vunpack.c.l.b16 %v77
    %v115 = vunpack.c.l.b16 %v78
    %v116 = vunpack.c.l.b16 %v79
    %v117 = vpack.c.b16 %v102, %v101
    %v118 = vpack.c.b16 %v104, %v103
    %v119 = vpack.c.b16 %v106, %v105
    %v120 = vpack.c.b16 %v108, %v107
    %v121 = vpack.c.b16 %v110, %v109
    %v122 = vpack.c.b16 %v112, %v111
    %v123 = vpack.c.b16 %v114, %v113
    %v124 = vpack.c.b16 %v116, %v115
    %133 = vmatpush.bf16.msra.mxu0 %v124
    %134 = vmatpush.bf16.msra.mxu0 %v123
    %135 = vmatpush.bf16.msra.mxu0 %v122
    %136 = vmatpush.bf16.msra.mxu0 %v121
    %137 = vmatpush.bf16.msra.mxu0 %v120
    %138 = vmatpush.bf16.msra.mxu0 %v119
    %139 = vmatpush.bf16.msra.mxu0 %v118
    %140 = vmatpush.bf16.msra.mxu0 %v117
    %141 = vmatmul.bf16.gmra.mxu0 %v62
    %v142 = vpop.f32.mrf.mxu0
    %v143 = vadd.f32 %v83, %v142
    %v144 = vpop.f32.mrf.mxu0
    %145 = vdwg.mxu0
    %v146 = vmax.f32 %v143, 0.0
    %v147 = vpack.c.bf16 %v146, %v146
    %s148 = scalar_lea.vmem [#allocation2], 128
    %v149 = vld [vmem:[%s148] sm:$0xf]
    %v150 = vld [vmem:[%s148 + $0x4] sm:$0xf]
    %v151 = vld [vmem:[%s148 + $0x8] sm:$0xf]
    %v152 = vld [vmem:[%s148 + $0xc] sm:$0xf]
    %v153 = vld [vmem:[%s148 + $0x10] sm:$0xf]
    %v154 = vld [vmem:[%s148 + $0x14] sm:$0xf]
    %v155 = vld [vmem:[%s148 + $0x18] sm:$0xf]
    %v156 = vld [vmem:[%s148 + $0x1c] sm:$0xf]
    %v157 = vld [vmem:[%s148 + $0x20] sm:$0xf]
    %v158 = vld [vmem:[%s148 + $0x24] sm:$0xf]
    %v159 = vld [vmem:[%s148 + $0x28] sm:$0xf]
    %v160 = vld [vmem:[%s148 + $0x2c] sm:$0xf]
    %v161 = vld [vmem:[%s148 + $0x30] sm:$0xf]
    %v162 = vld [vmem:[%s148 + $0x34] sm:$0xf]
    %v163 = vld [vmem:[%s148 + $0x38] sm:$0xf]
    %v164 = vld [vmem:[%s148 + $0x3c] sm:$0xf]
    %s165 = scalar_lea.vmem %s2, 2
    %v166 = vld [vmem:[%s165] sm:$0x1]
    %v168 = vperm.slane %v166, 0
    %v186 = vunpack.c.l.b16 %v149
    %v187 = vunpack.c.l.b16 %v150
    %v188 = vunpack.c.l.b16 %v151
    %v189 = vunpack.c.l.b16 %v152
    %v190 = vunpack.c.l.b16 %v153
    %v191 = vunpack.c.l.b16 %v154
    %v192 = vunpack.c.l.b16 %v155
    %v193 = vunpack.c.l.b16 %v156
    %v194 = vunpack.c.l.b16 %v157
    %v195 = vunpack.c.l.b16 %v158
    %v196 = vunpack.c.l.b16 %v159
    %v197 = vunpack.c.l.b16 %v160
    %v198 = vunpack.c.l.b16 %v161
    %v199 = vunpack.c.l.b16 %v162
    %v200 = vunpack.c.l.b16 %v163
    %v201 = vunpack.c.l.b16 %v164
    %v202 = vpack.c.b16 %v187, %v186
    %v203 = vpack.c.b16 %v189, %v188
    %v204 = vpack.c.b16 %v191, %v190
    %v205 = vpack.c.b16 %v193, %v192
    %v206 = vpack.c.b16 %v195, %v194
    %v207 = vpack.c.b16 %v197, %v196
    %v208 = vpack.c.b16 %v199, %v198
    %v209 = vpack.c.b16 %v201, %v200
    %218 = vmatpush.bf16.msra.mxu0 %v209
    %219 = vmatpush.bf16.msra.mxu0 %v208
    %220 = vmatpush.bf16.msra.mxu0 %v207
    %221 = vmatpush.bf16.msra.mxu0 %v206
    %222 = vmatpush.bf16.msra.mxu0 %v205
    %223 = vmatpush.bf16.msra.mxu0 %v204
    %224 = vmatpush.bf16.msra.mxu0 %v203
    %225 = vmatpush.bf16.msra.mxu0 %v202
    %226 = vmatmul.bf16.gmra.mxu0 %v147
    %v227 = vpop.f32.mrf.mxu0
    %v228 = vadd.f32 %v168, %v227
    %v229 = vpop.f32.mrf.mxu0
    %230 = vdwg.mxu0
    %v231 = vmax.f32 %v228, 0.0
    %v232 = vlaneseq
    %v233 = vand.u32 %v232, 127
    %vm234 = vcmp.lt.s32.totalorder %v233, 8
    %v235 = vsel %vm234, %v231, -1e+30
    %236 = vmax.xlane.f32.xlu0 %v235
    %v237 = vpop.xlane.xlu0 %236
    %v238 = vsub.f32 %v235, %v237
    %v239 = vmul.f32 %v238, 1.442695
    %v240 = vpow.pop %v239
    %v241 = vsel %vm234, %v240, 0.0
    %242 = vadd.xlane.f32.xlu0 %v241
    %v243 = vpop.xlane.xlu0 %242
    %v244 = vrcp.pop %v243
    %v245 = vmul.f32 %v243, %v244
    %v246 = vsub.f32 1.0, %v245
    %v247 = vmul.f32 %v244, %v246
    %v248 = vadd.f32 %v244, %v247
    %vm249 = vweird.f32 %v243
    %vm250 = vweird.f32 %v244
    %vm251 = vmor %vm249, %vm250
    %v252 = vsel %vm251, %v244, %v248
    %v253 = vand.u32 2147483647, %v243
    %vm254 = vcmp.eq.f32.partialorder %v253, 8.507059e+37
    %v255 = vand.u32 %v243, 2147483648
    %v256 = vor.u32 1.1754944e-38, %v255
    %v257 = vsel %vm254, %v256, %v252
    %v258 = vmul.f32 %v241, %v257
    %vm259 = vcmask 64512
    %260 = vst.msk [vmem:[%s3] sm:$0xff] %vm259, %v258
    // Predicated region
    $region18: #{netconf_forward.1} parent=1 // pred_check
      _
    $region19: #{netconf_forward.1} parent=1 // pred_check_branch
      %262 = sbr.rel (0) target = $region21
    $region20: #{netconf_forward.1} parent=1 // pred_region
      _
    $region21: #{netconf_forward.1} parent=1 // pred_fallthru
      _
    // Predicated region
    $region22: #{netconf_forward.1} parent=1 // pred_check
      _
    $region23: #{netconf_forward.1} parent=1 // pred_check_branch
      %264 = sbr.rel (0) target = $region25
    $region24: #{netconf_forward.1} parent=1 // pred_region
      _
    $region25: #{netconf_forward.1} parent=1 // pred_fallthru
      _
    %265 = vsyncpa [#allocation3], 1

</llo_original>
